<compile_context>
chip_gen: v5e
topology: v5e:2x2
jax: 0.10.0
libtpu: 0.0.40
codegen_flags: <defaults>
</compile_context>

<pallas_src>
import functools

import jax
import jax.numpy as jnp
from jax.experimental import pallas as pl
from jax.experimental.pallas import tpu as pltpu

HIDDEN_DIM = 128
LANE = 128
SUBLANE = 8
TB_CAP = 4096           # batch-tile cap (rows); review: 1024-4096 sweet spot
NEG_BIG = -1e30         # padded-logit bias (f32-pinned): exp(NEG_BIG - max) == 0


def _round_up(n, m):
    return ((n + m - 1) // m) * m


def actor_kernel(x_ref, w1_ref, b1_ref, w2_ref, b2_ref, o_ref):
    # fc1 + ReLU: bf16 operands on the MXU, f32 accumulation.
    h = jnp.dot(x_ref[...], w1_ref[...], preferred_element_type=jnp.float32)
    h = jnp.maximum(h + b1_ref[...], 0.0)

    # fc2: hidden activation cast back to bf16 for the MXU, bias add in f32.
    logits = jnp.dot(h.astype(jnp.bfloat16), w2_ref[...],
                     preferred_element_type=jnp.float32)
    logits = logits + b2_ref[...]          # padded lanes receive -1e30 here

    # Numerically-stable softmax over the 128 (padded) lanes.
    # Exact division (approx reciprocal broke the row-sum tolerance).
    m = jnp.max(logits, axis=-1, keepdims=True)
    e = jnp.exp(logits - m)                # padded lanes -> exactly 0
    denom = jnp.sum(e, axis=-1, keepdims=True)
    o_ref[...] = (e / denom).astype(o_ref.dtype)


def prepare_actor_params(w1, b1, w2, b2):
    """One-time pad + bf16 cast of the weights (hoisted off the per-call path)."""
    obs_dim, hidden = w1.shape
    act_dim = w2.shape[1]
    k_pad = _round_up(obs_dim, SUBLANE)     # small alignment pad only (not 128)
    n_pad = _round_up(act_dim, LANE)        # lane-dense logits / output

    w1_p = (jnp.zeros((k_pad, hidden), jnp.bfloat16)
            .at[:obs_dim, :].set(w1.astype(jnp.bfloat16)))
    b1_p = b1.reshape(1, hidden).astype(jnp.float32)
    w2_p = (jnp.zeros((hidden, n_pad), jnp.bfloat16)
            .at[:, :act_dim].set(w2.astype(jnp.bfloat16)))
    b2_p = (jnp.full((1, n_pad), NEG_BIG, jnp.float32)
            .at[0, :act_dim].set(b2.reshape(-1).astype(jnp.float32)))
    return w1_p, b1_p, w2_p, b2_p


@functools.partial(jax.jit, static_argnames=("act_dim", "out_dtype"))
def actor_forward_prepared(x, w1_p, b1_p, w2_p, b2_p, *, act_dim,
                           out_dtype=jnp.float32):
    batch, obs_dim = x.shape
    k_pad, hidden = w1_p.shape
    n_pad = w2_p.shape[1]

    # Batch tile: largest multiple of 16 up to TB_CAP; if that would leave a
    # single grid step (and there is room), halve it so the "parallel" batch
    # axis gives v7x megacore at least two steps.
    tb = min(TB_CAP, _round_up(batch, 16))
    if _round_up(batch, tb) // tb < 2 and tb >= 32:
        tb = _round_up(tb // 2, 16)
    b_pad = _round_up(batch, tb)

    # Activation: bf16, padded only to (b_pad, k_pad) -- no 128-wide K pad.
    x_b = x.astype(jnp.bfloat16)
    if (b_pad, k_pad) != (batch, obs_dim):
        x_b = (jnp.zeros((b_pad, k_pad), jnp.bfloat16)
               .at[:batch, :obs_dim].set(x_b))

    grid = (b_pad // tb,)

    out_padded = pl.pallas_call(
        actor_kernel,
        out_shape=jax.ShapeDtypeStruct((b_pad, n_pad), out_dtype),
        grid_spec=pltpu.PrefetchScalarGridSpec(
            num_scalar_prefetch=0,
            grid=grid,
            in_specs=[
                pl.BlockSpec((tb, k_pad), lambda i: (i, 0)),      # x tile
                pl.BlockSpec((k_pad, hidden), lambda i: (0, 0)),  # W1 resident
                pl.BlockSpec((1, hidden), lambda i: (0, 0)),      # b1 resident
                pl.BlockSpec((hidden, n_pad), lambda i: (0, 0)),  # W2 resident
                pl.BlockSpec((1, n_pad), lambda i: (0, 0)),       # b2 resident
            ],
            out_specs=pl.BlockSpec((tb, n_pad), lambda i: (i, 0)),
        ),
        compiler_params=pltpu.CompilerParams(
            dimension_semantics=("parallel",),
        ),
    )(x_b, w1_p, b1_p, w2_p, b2_p)

    return out_padded[:batch, :act_dim]


def actor_forward(x, w1, b1, w2, b2):
    """Convenience wrapper: prepare params (pad/cast) then run the kernel."""
    w1_p, b1_p, w2_p, b2_p = prepare_actor_params(w1, b1, w2, b2)
    return actor_forward_prepared(x, w1_p, b1_p, w2_p, b2_p,
                                  act_dim=w2.shape[1])


def init_actor_params(key, obs_dim, act_dim):
    """torch.nn.Linear default init: U[-1/sqrt(fan_in), 1/sqrt(fan_in)]."""
    k1, k2, k3, k4 = jax.random.split(key, 4)
    bound1 = 1.0 / jnp.sqrt(obs_dim)
    bound2 = 1.0 / jnp.sqrt(HIDDEN_DIM)
    w1 = jax.random.uniform(k1, (obs_dim, HIDDEN_DIM), jnp.float32, -bound1, bound1)
    b1 = jax.random.uniform(k2, (1, HIDDEN_DIM), jnp.float32, -bound1, bound1)
    w2 = jax.random.uniform(k3, (HIDDEN_DIM, act_dim), jnp.float32, -bound2, bound2)
    b2 = jax.random.uniform(k4, (1, act_dim), jnp.float32, -bound2, bound2)
    return w1, b1, w2, b2


def reference_forward_f32(x, w1, b1, w2, b2):
    """Exact PyTorch-semantics reference (all f32)."""
    h = jnp.maximum(x @ w1 + b1, 0.0)
    return jax.nn.softmax(h @ w2 + b2, axis=-1)


def reference_forward_bf16(x, w1, b1, w2, b2):
    """Reference with the same bf16 operand rounding as the kernel."""
    xb = x.astype(jnp.bfloat16)
    w1b = w1.astype(jnp.bfloat16)
    w2b = w2.astype(jnp.bfloat16)
    h = jnp.maximum(
        jnp.dot(xb, w1b, preferred_element_type=jnp.float32) + b1, 0.0)
    logits = jnp.dot(h.astype(jnp.bfloat16), w2b,
                     preferred_element_type=jnp.float32) + b2
    return jax.nn.softmax(logits, axis=-1)


if __name__ == "__main__":
    key = jax.random.PRNGKey(0)
    k_x, k_p = jax.random.split(key)

    batch, obs_dim, act_dim = 8, 32, 8
    x = jax.random.normal(k_x, (batch, obs_dim), jnp.float32)
    w1, b1, w2, b2 = init_actor_params(k_p, obs_dim, act_dim)

    # Weights are padded / cast ONCE; only the activation path runs per call.
    w1_p, b1_p, w2_p, b2_p = prepare_actor_params(w1, b1, w2, b2)
    out = actor_forward_prepared(x, w1_p, b1_p, w2_p, b2_p, act_dim=act_dim)
    jax.block_until_ready(out)
    assert out.shape == (batch, act_dim)

    # Tight check against a reference with matching bf16 operand rounding.
    ref_bf16 = reference_forward_bf16(x, w1, b1, w2, b2)
    assert jnp.allclose(out, ref_bf16, atol=2e-3, rtol=2e-3)

    # Loose sanity check against the exact f32 PyTorch semantics.
    ref_f32 = reference_forward_f32(x, w1, b1, w2, b2)
    assert jnp.allclose(out, ref_f32, atol=5e-2, rtol=5e-2)

    # Softmax rows sum to 1 (exact division in the kernel).
    assert jnp.allclose(jnp.sum(out, axis=-1), 1.0, atol=1e-3)

    print("KERNEL_OK")
</pallas_src>

<mosaic_0001>
module attributes {stable_mosaic.version = 11 : i64} {
  func.func @actor_kernel(%arg0: i32, %arg1: memref<16x32xbf16, #tpu.memory_space<vmem>>, %arg2: memref<32x128xbf16, #tpu.memory_space<vmem>>, %arg3: memref<1x128xf32, #tpu.memory_space<vmem>>, %arg4: memref<128x128xbf16, #tpu.memory_space<vmem>>, %arg5: memref<1x128xf32, #tpu.memory_space<vmem>>, %arg6: memref<16x128xf32, #tpu.memory_space<vmem>>) attributes {dimension_semantics = [#tpu.dimension_semantics<parallel>], iteration_bounds = array<i64: 1>, scalar_prefetch = 0 : i64, scratch_operands = 0 : i64, tpu.core_type = #tpu.core_type<tc>, window_params = [{transform_indices = @transform_0, window_bounds = array<i64: 16, 32>}, {pipeline_mode = #tpu.pipeline_mode<synchronous>, transform_indices = @transform_1, window_bounds = array<i64: 32, 128>}, {pipeline_mode = #tpu.pipeline_mode<synchronous>, transform_indices = @transform_2, window_bounds = array<i64: 1, 128>}, {pipeline_mode = #tpu.pipeline_mode<synchronous>, transform_indices = @transform_3, window_bounds = array<i64: 128, 128>}, {pipeline_mode = #tpu.pipeline_mode<synchronous>, transform_indices = @transform_4, window_bounds = array<i64: 1, 128>}, {transform_indices = @transform_5, window_bounds = array<i64: 16, 128>}]} {
    %c0 = arith.constant 0 : index
    %c0_0 = arith.constant 0 : index
    %0 = vector.load %arg1[%c0, %c0_0] : memref<16x32xbf16, #tpu.memory_space<vmem>>, vector<16x32xbf16>
    %c0_1 = arith.constant 0 : index
    %c0_2 = arith.constant 0 : index
    %1 = vector.load %arg2[%c0_1, %c0_2] : memref<32x128xbf16, #tpu.memory_space<vmem>>, vector<32x128xbf16>
    %cst = arith.constant dense<0.000000e+00> : vector<16x128xf32>
    %2 = tpu.matmul %0, %1, %cst {dimension_numbers = #tpu.dot_dimension_numbers<[1], [0], [0], [1], [0, 0, 1, 1], [], []>} : vector<16x32xbf16>, vector<32x128xbf16>, vector<16x128xf32> -> vector<16x128xf32>
    %c0_3 = arith.constant 0 : index
    %c0_4 = arith.constant 0 : index
    %3 = vector.load %arg3[%c0_3, %c0_4] : memref<1x128xf32, #tpu.memory_space<vmem>>, vector<1x128xf32>
    %4 = vector.broadcast %3 : vector<1x128xf32> to vector<16x128xf32>
    %5 = arith.addf %2, %4 : vector<16x128xf32>
    %cst_5 = arith.constant 0.000000e+00 : f32
    %6 = vector.broadcast %cst_5 : f32 to vector<16x128xf32>
    %7 = arith.maximumf %5, %6 : vector<16x128xf32>
    %8 = arith.truncf %7 : vector<16x128xf32> to vector<16x128xbf16>
    %c0_6 = arith.constant 0 : index
    %c0_7 = arith.constant 0 : index
    %9 = vector.load %arg4[%c0_6, %c0_7] : memref<128x128xbf16, #tpu.memory_space<vmem>>, vector<128x128xbf16>
    %cst_8 = arith.constant dense<0.000000e+00> : vector<16x128xf32>
    %10 = tpu.matmul %8, %9, %cst_8 {dimension_numbers = #tpu.dot_dimension_numbers<[1], [0], [0], [1], [0, 0, 1, 1], [], []>} : vector<16x128xbf16>, vector<128x128xbf16>, vector<16x128xf32> -> vector<16x128xf32>
    %c0_9 = arith.constant 0 : index
    %c0_10 = arith.constant 0 : index
    %11 = vector.load %arg5[%c0_9, %c0_10] : memref<1x128xf32, #tpu.memory_space<vmem>>, vector<1x128xf32>
    %12 = vector.broadcast %11 : vector<1x128xf32> to vector<16x128xf32>
    %13 = arith.addf %10, %12 : vector<16x128xf32>
    %cst_11 = arith.constant dense<0xFF800000> : vector<16xf32>
    %14 = vector.multi_reduction <maximumf>, %13, %cst_11 [1] : vector<16x128xf32> to vector<16xf32>
    %15 = vector.shape_cast %14 : vector<16xf32> to vector<16x1xf32>
    %16 = vector.broadcast %15 : vector<16x1xf32> to vector<16x128xf32>
    %17 = arith.subf %13, %16 : vector<16x128xf32>
    %18 = math.exp %17 : vector<16x128xf32>
    %cst_12 = arith.constant dense<0.000000e+00> : vector<16xf32>
    %19 = vector.multi_reduction <add>, %18, %cst_12 [1] : vector<16x128xf32> to vector<16xf32>
    %20 = vector.shape_cast %19 : vector<16xf32> to vector<16x1xf32>
    %21 = vector.broadcast %20 : vector<16x1xf32> to vector<16x128xf32>
    %22 = arith.divf %18, %21 : vector<16x128xf32>
    %c0_13 = arith.constant 0 : index
    %c0_14 = arith.constant 0 : index
    %23 = vector.load %arg6[%c0_13, %c0_14] : memref<16x128xf32, #tpu.memory_space<vmem>>, vector<16x128xf32>
    tpu.vector_store %arg6[%c0_13, %c0_14], %22 {strides = array<i32>} : memref<16x128xf32, #tpu.memory_space<vmem>>, vector<16x128xf32>,
    return
  }
  func.func @transform_0(%arg0: i32) -> (i32, i32) {
    %c0_i32 = arith.constant 0 : i32
    %c0_i32_0 = arith.constant 0 : i32
    return %arg0, %c0_i32 : i32, i32
  }
  func.func @transform_1(%arg0: i32) -> (i32, i32) {
    %c0_i32 = arith.constant 0 : i32
    %c0_i32_0 = arith.constant 0 : i32
    %c0_i32_1 = arith.constant 0 : i32
    return %c0_i32, %c0_i32_0 : i32, i32
  }
  func.func @transform_2(%arg0: i32) -> (i32, i32) {
    %c0_i32 = arith.constant 0 : i32
    %c0_i32_0 = arith.constant 0 : i32
    %c0_i32_1 = arith.constant 0 : i32
    return %c0_i32, %c0_i32_0 : i32, i32
  }
  func.func @transform_3(%arg0: i32) -> (i32, i32) {
    %c0_i32 = arith.constant 0 : i32
    %c0_i32_0 = arith.constant 0 : i32
    %c0_i32_1 = arith.constant 0 : i32
    return %c0_i32, %c0_i32_0 : i32, i32
  }
  func.func @transform_4(%arg0: i32) -> (i32, i32) {
    %c0_i32 = arith.constant 0 : i32
    %c0_i32_0 = arith.constant 0 : i32
    %c0_i32_1 = arith.constant 0 : i32
    return %c0_i32, %c0_i32_0 : i32, i32
  }
  func.func @transform_5(%arg0: i32) -> (i32, i32) {
    %c0_i32 = arith.constant 0 : i32
    %c0_i32_0 = arith.constant 0 : i32
    return %arg0, %c0_i32 : i32, i32
  }
}

</mosaic_0001>

<llo_original>
// kernel: actor_forward_prepared.1
$region0: #{actor_forward_prepared.1}
  #allocation0 [shape = 'u32[]', space=smem, size = 0x4, offset = 0x4, fixed_abs, tag = 'smem constant byte address 0x4 - core index']
  #allocation1 [shape = 'u32[72,128]{1,0:T(1,128)}', space=vmem, size = 0x9000, scoped, tag = 'internal scratch']
  %s0 = inlined_call_operand.vmem [shape: bf16[16,32], index: 0, kind: input, shape index: {}]
  %s1 = inlined_call_operand.vmem [shape: bf16[32,128], index: 1, kind: input, shape index: {}]
  %s2 = inlined_call_operand.vmem [shape: f32[1,128], index: 2, kind: input, shape index: {}]
  %s3 = inlined_call_operand.hbm [shape: bf16[128,128], index: 3, kind: input, shape index: {}]
  %s4 = inlined_call_operand.vmem [shape: f32[1,128], index: 4, kind: input, shape index: {}]
  %s5 = inlined_call_operand.vmem [shape: f32[16,128], index: 5, kind: output, shape index: {}]
  %s6 = sld [smem:[#allocation0]]
  $region34: #{actor_forward_prepared.1} parent=0
    _
  %s8 = ssub.s32 1, %s6
  %s9 = scalar_select 0, %s8, %s6
  $region1: #{actor_forward_prepared.1} parent=0
    #allocation2 [shape = 'u8[32768]{0}', space=vmem, size = 0x8000, scoped, tag = 'input window, operand 3, single buffered']
    #allocation3 [shape = 's32[1]{0}', space=sflag, size = 0x4, scoped, tag = 'scoped memory for actor_forward_prepared.1']
    %10 = vsyncpa [#allocation3], 0
    // Predicated region
    $region2: #{actor_forward_prepared.1} parent=1 // pred_check
      _
    $region3: #{actor_forward_prepared.1} parent=1 // pred_check_branch
      %12 = sbr.rel (0) target = $region5
    $region4: #{actor_forward_prepared.1} parent=1 // pred_region
      _
    $region5: #{actor_forward_prepared.1} parent=1 // pred_fallthru
      _
    // Predicated region
    $region6: #{actor_forward_prepared.1} parent=1 // pred_check
      _
    $region7: #{actor_forward_prepared.1} parent=1 // pred_check_branch
      %14 = sbr.rel (0) target = $region9
    $region8: #{actor_forward_prepared.1} parent=1 // pred_region
      _
    $region9: #{actor_forward_prepared.1} parent=1 // pred_fallthru
      _
    // Predicated region
    $region10: #{actor_forward_prepared.1} parent=1 // pred_check
      _
    $region11: #{actor_forward_prepared.1} parent=1 // pred_check_branch
      %16 = sbr.rel (0) target = $region13
    $region12: #{actor_forward_prepared.1} parent=1 // pred_region
      _
    $region13: #{actor_forward_prepared.1} parent=1 // pred_fallthru
      _
    // Predicated region
    $region14: #{actor_forward_prepared.1} parent=1 // pred_check
      _
    $region15: #{actor_forward_prepared.1} parent=1 // pred_check_branch
      %18 = sbr.rel (0) target = $region17
    $region16: #{actor_forward_prepared.1} parent=1 // pred_region
      %20 = vsyncadd [#allocation3], 0
      %s21 = sshll.u32 %s3, 4
      %s22 = int_to_ptr.hbm [resolvable:$true] %s21
      %s23 = sshll.u32 [#allocation2], 4
      %s24 = int_to_ptr.vmem [resolvable:$true] %s23
      %29 = dma.hbm_to_vmem [thread:$0]  %s22, 1024, %s24, [#allocation3], 64, 64, 4
    $region17: #{actor_forward_prepared.1} parent=1 // pred_fallthru
      _
    // Predicated region
    $region18: #{actor_forward_prepared.1} parent=1 // pred_check
      _
    $region19: #{actor_forward_prepared.1} parent=1 // pred_check_branch
      %31 = sbr.rel (0) target = $region21
    $region20: #{actor_forward_prepared.1} parent=1 // pred_region
      _
    $region21: #{actor_forward_prepared.1} parent=1 // pred_fallthru
      _
    // Predicated region
    $region22: #{actor_forward_prepared.1} parent=1 // pred_check
      _
    $region23: #{actor_forward_prepared.1} parent=1 // pred_check_branch
      %33 = sbr.rel (0) target = $region25
    $region24: #{actor_forward_prepared.1} parent=1 // pred_region
      %35 = dma.done [#allocation3], 1024
    $region25: #{actor_forward_prepared.1} parent=1 // pred_fallthru
      _
    %v37 = vld [vmem:[%s0] sm:$0xf]
    %v38 = vld [vmem:[%s0 + $0x4] sm:$0xf]
    %v39 = vld [vmem:[%s1] sm:$0xf]
    %v40 = vld [vmem:[%s1 + $0x4] sm:$0xf]
    %v41 = vld [vmem:[%s1 + $0x8] sm:$0xf]
    %v42 = vld [vmem:[%s1 + $0xc] sm:$0xf]
    %v43 = vld [vmem:[%s2] sm:$0x1]
    %v45 = vperm.slane %v43, 0
    %v49 = vunpack.c.l.b16 %v37
    %v50 = vunpack.c.l.b16 %v38
    %v51 = vpack.c.b16 %v50, %v49
    %v56 = vunpack.c.l.b16 %v39
    %v57 = vunpack.c.l.b16 %v40
    %v58 = vunpack.c.l.b16 %v41
    %v59 = vunpack.c.l.b16 %v42
    %v60 = vpack.c.b16 %v57, %v56
    %v61 = vpack.c.b16 %v59, %v58
    %vm64 = vcmask 261120
    %v66 = vsel %vm64, %v51, 0
    %68 = vmatpush.bf16.msra.mxu0 0
    %69 = vmatpush.bf16.msra.mxu0 0
    %70 = vmatpush.bf16.msra.mxu0 0
    %71 = vmatpush.bf16.msra.mxu0 0
    %72 = vmatpush.bf16.msra.mxu0 0
    %73 = vmatpush.bf16.msra.mxu0 0
    %74 = vmatpush.bf16.msra.mxu0 %v61
    %75 = vmatpush.bf16.msra.mxu0 %v60
    %76 = vmatmul.bf16.gmra.mxu0 %v66
    %v77 = vpop.f32.mrf.mxu0
    %v78 = vadd.f32 %v45, %v77
    %v79 = vpop.f32.mrf.mxu0
    %v80 = vadd.f32 %v45, %v79
    %81 = vdwg.mxu0
    %v82 = vmax.f32 %v78, 0.0
    %v83 = vmax.f32 %v80, 0.0
    %v84 = vpack.c.bf16 %v83, %v82
    %v85 = vld [vmem:[#allocation2] sm:$0xf]
    %v86 = vld [vmem:[#allocation2 + $0x4] sm:$0xf]
    %v87 = vld [vmem:[#allocation2 + $0x8] sm:$0xf]
    %v88 = vld [vmem:[#allocation2 + $0xc] sm:$0xf]
    %v89 = vld [vmem:[#allocation2 + $0x10] sm:$0xf]
    %v90 = vld [vmem:[#allocation2 + $0x14] sm:$0xf]
    %v91 = vld [vmem:[#allocation2 + $0x18] sm:$0xf]
    %v92 = vld [vmem:[#allocation2 + $0x1c] sm:$0xf]
    %v93 = vld [vmem:[#allocation2 + $0x20] sm:$0xf]
    %v94 = vld [vmem:[#allocation2 + $0x24] sm:$0xf]
    %v95 = vld [vmem:[#allocation2 + $0x28] sm:$0xf]
    %v96 = vld [vmem:[#allocation2 + $0x2c] sm:$0xf]
    %v97 = vld [vmem:[#allocation2 + $0x30] sm:$0xf]
    %v98 = vld [vmem:[#allocation2 + $0x34] sm:$0xf]
    %v99 = vld [vmem:[#allocation2 + $0x38] sm:$0xf]
    %v100 = vld [vmem:[#allocation2 + $0x3c] sm:$0xf]
    %v101 = vld [vmem:[%s4] sm:$0x1]
    %v103 = vperm.slane %v101, 0
    %v121 = vunpack.c.l.b16 %v85
    %v122 = vunpack.c.l.b16 %v86
    %v123 = vunpack.c.l.b16 %v87
    %v124 = vunpack.c.l.b16 %v88
    %v125 = vunpack.c.l.b16 %v89
    %v126 = vunpack.c.l.b16 %v90
    %v127 = vunpack.c.l.b16 %v91
    %v128 = vunpack.c.l.b16 %v92
    %v129 = vunpack.c.l.b16 %v93
    %v130 = vunpack.c.l.b16 %v94
    %v131 = vunpack.c.l.b16 %v95
    %v132 = vunpack.c.l.b16 %v96
    %v133 = vunpack.c.l.b16 %v97
    %v134 = vunpack.c.l.b16 %v98
    %v135 = vunpack.c.l.b16 %v99
    %v136 = vunpack.c.l.b16 %v100
    %v137 = vpack.c.b16 %v122, %v121
    %v138 = vpack.c.b16 %v124, %v123
    %v139 = vpack.c.b16 %v126, %v125
    %v140 = vpack.c.b16 %v128, %v127
    %v141 = vpack.c.b16 %v130, %v129
    %v142 = vpack.c.b16 %v132, %v131
    %v143 = vpack.c.b16 %v134, %v133
    %v144 = vpack.c.b16 %v136, %v135
    %153 = vmatpush.bf16.msra.mxu0 %v144
    %154 = vmatpush.bf16.msra.mxu0 %v143
    %155 = vmatpush.bf16.msra.mxu0 %v142
    %156 = vmatpush.bf16.msra.mxu0 %v141
    %157 = vmatpush.bf16.msra.mxu0 %v140
    %158 = vmatpush.bf16.msra.mxu0 %v139
    %159 = vmatpush.bf16.msra.mxu0 %v138
    %160 = vmatpush.bf16.msra.mxu0 %v137
    %161 = vmatmul.bf16.gmra.mxu0 %v84
    %v162 = vpop.f32.mrf.mxu0
    %v163 = vadd.f32 %v103, %v162
    %v164 = vpop.f32.mrf.mxu0
    %v165 = vadd.f32 %v103, %v164
    %166 = vdwg.mxu0
    %167 = vmax.xlane.f32.xlu0 %v163
    %v168 = vpop.xlane.xlu0 %167
    %169 = vmax.xlane.f32.xlu0 %v165
    %v170 = vpop.xlane.xlu0 %169
    %v171 = vsub.f32 %v163, %v168
    %v172 = vsub.f32 %v165, %v170
    %v173 = vmul.f32 %v171, 1.442695
    %v174 = vpow.pop %v173
    %v175 = vmul.f32 %v172, 1.442695
    %v176 = vpow.pop %v175
    %177 = vadd.xlane.f32.xlu0 %v174
    %v178 = vpop.xlane.xlu0 %177
    %179 = vadd.xlane.f32.xlu0 %v176
    %v180 = vpop.xlane.xlu0 %179
    %v181 = vrcp.pop %v178
    %v182 = vmul.f32 %v178, %v181
    %v183 = vsub.f32 1.0, %v182
    %v184 = vmul.f32 %v181, %v183
    %v185 = vadd.f32 %v181, %v184
    %vm186 = vweird.f32 %v178
    %vm187 = vweird.f32 %v181
    %vm188 = vmor %vm186, %vm187
    %v189 = vsel %vm188, %v181, %v185
    %v190 = vand.u32 2147483647, %v178
    %vm191 = vcmp.eq.f32.partialorder %v190, 8.507059e+37
    %v192 = vand.u32 %v178, 2147483648
    %v193 = vor.u32 1.1754944e-38, %v192
    %v194 = vsel %vm191, %v193, %v189
    %v195 = vmul.f32 %v174, %v194
    %v196 = vrcp.pop %v180
    %v197 = vmul.f32 %v180, %v196
    %v198 = vsub.f32 1.0, %v197
    %v199 = vmul.f32 %v196, %v198
    %v200 = vadd.f32 %v196, %v199
    %vm201 = vweird.f32 %v180
    %vm202 = vweird.f32 %v196
    %vm203 = vmor %vm201, %vm202
    %v204 = vsel %vm203, %v196, %v200
    %v205 = vand.u32 2147483647, %v180
    %vm206 = vcmp.eq.f32.partialorder %v205, 8.507059e+37
    %v207 = vand.u32 %v180, 2147483648
    %v208 = vor.u32 1.1754944e-38, %v207
    %v209 = vsel %vm206, %v208, %v204
    %v210 = vmul.f32 %v176, %v209
    %211 = vst [vmem:[%s5] sm:$0xff] %v195
    %212 = vst [vmem:[%s5 + $0x8] sm:$0xff] %v210
    // Predicated region
    $region26: #{actor_forward_prepared.1} parent=1 // pred_check
      _
    $region27: #{actor_forward_prepared.1} parent=1 // pred_check_branch
      %214 = sbr.rel (0) target = $region29
    $region28: #{actor_forward_prepared.1} parent=1 // pred_region
      _
    $region29: #{actor_forward_prepared.1} parent=1 // pred_fallthru
      _
    // Predicated region
    $region30: #{actor_forward_prepared.1} parent=1 // pred_check
      _
    $region31: #{actor_forward_prepared.1} parent=1 // pred_check_branch
      %216 = sbr.rel (0) target = $region33
    $region32: #{actor_forward_prepared.1} parent=1 // pred_region
      _
    $region33: #{actor_forward_prepared.1} parent=1 // pred_fallthru
      _
    %217 = vsyncpa [#allocation3], 1

</llo_original>
